<compile_context>
chip_gen: v7x
topology: tpu7x:2x2x1
jax: 0.10.0
libtpu: 0.0.40
codegen_flags: <defaults>
</compile_context>

<pallas_src>
import jax
import jax.numpy as jnp
from jax.experimental import pallas as pl
from jax.experimental.pallas import tpu as pltpu

NEG_SLOPE = 0.01   # nn.LeakyReLU default negative_slope
BN_EPS = 1e-5      # nn.BatchNorm2d default eps


# ---------------------------------------------------------------------------
# Fused Pallas kernel: conv1+BN1+LeakyReLU -> conv2+BN2 -> +1x1 resampler+BN
#                      -> LeakyReLU, per batch element, all resident in VMEM.
# Layout: channels-first with spatial flattened, (C, H*W); HW is the lane dim.
# ---------------------------------------------------------------------------
def _make_fused_kernel(H, W, k, pad):
    HW = H * W
    # Static per-tap spatial offsets (dy, dx) and flattened-index shift s.
    taps = [(ky - pad, kx - pad, (ky - pad) * W + (kx - pad))
            for ky in range(k) for kx in range(k)]

    def leaky(v):
        return jnp.where(v >= 0.0, v, NEG_SLOPE * v)

    def kernel(x_ref, m_ref, w1_ref, b1_ref, w2_ref, b2_ref, wr_ref, br_ref, o_ref):
        masks = m_ref[...]                       # (k*k, HW) f32 {0,1} border masks

        def im2col(u):
            # u: (C, HW) f32  ->  (k*k*C, HW) bf16, built entirely in VMEM.
            # For tap (dy,dx): value at output pixel i is u[i + dy*W + dx] when the
            # tap stays inside the image, else 0 ('same' zero padding).  The
            # circular roll picks up garbage only at positions the mask zeroes.
            parts = []
            for t, (dy, dx, s) in enumerate(taps):
                if dy == 0 and dx == 0:
                    parts.append(u)
                else:
                    shifted = pltpu.roll(u, shift=(-s) % HW, axis=1)
                    parts.append(shifted * masks[t:t + 1, :])
            return jnp.concatenate(parts, axis=0).astype(jnp.bfloat16)

        x = x_ref[0]                             # (Cin, HW) f32

        # conv1 + BN1 (scale pre-folded into w1) + LeakyReLU
        o1 = jnp.dot(w1_ref[...], im2col(x),
                     preferred_element_type=jnp.float32) + b1_ref[...]
        o1 = leaky(o1)                           # (Cout, HW) f32
        # Dropout2d: identity in inference mode.

        # conv2 + BN2 (stays in vregs/VMEM, no HBM round-trip)
        o2 = jnp.dot(w2_ref[...], im2col(o1),
                     preferred_element_type=jnp.float32) + b2_ref[...]

        # residual path: 1x1 conv + BN (Resample_Channels) from the resident x tile
        res = jnp.dot(wr_ref[...], x.astype(jnp.bfloat16),
                      preferred_element_type=jnp.float32) + br_ref[...]

        o_ref[0] = leaky(o2 + res).astype(o_ref.dtype)

    return kernel


def _tap_masks(H, W, k, pad):
    """(k*k, H*W) f32 0/1 masks: validity of each conv tap at each output pixel."""
    yy, xx = jnp.meshgrid(jnp.arange(H), jnp.arange(W), indexing="ij")
    masks = []
    for ky in range(k):
        dy = ky - pad
        for kx in range(k):
            dx = kx - pad
            valid = ((yy + dy >= 0) & (yy + dy < H) &
                     (xx + dx >= 0) & (xx + dx < W))
            masks.append(valid.reshape(H * W))
    return jnp.stack(masks).astype(jnp.float32)


def _fold_bn(conv_w, conv_b, gamma, beta, mean, var):
    """Fold inference BN into the conv:  BN(conv(x)) == w_mat @ cols + bias.
    Returns w_mat (Cout, k*k*Cin) bf16 with BN scale pre-multiplied, bias (Cout,1) f32."""
    cout, cin, kh, kw = conv_w.shape
    scale = gamma / jnp.sqrt(var + BN_EPS)                               # (cout,)
    # (ky, kx, cin) flattening matches the in-kernel im2col row order.
    w_mat = jnp.transpose(conv_w, (0, 2, 3, 1)).reshape(cout, kh * kw * cin)
    w_mat = (w_mat * scale[:, None]).astype(jnp.bfloat16)
    bias = (beta + scale * (conv_b - mean)).reshape(cout, 1).astype(jnp.float32)
    return w_mat, bias


# ---------------------------------------------------------------------------
# SEED_DEEP_LAYER forward (do_pool=False, in_channels != out_channels)
# ---------------------------------------------------------------------------
def seed_deep_layer_forward(x_nchw, raw, k):
    N, Cin, H, W = x_nchw.shape
    HW = H * W
    pad = (k - 1) // 2              # PyTorch even-kernel 'same': (pad, k-1-pad)

    w1, b1 = _fold_bn(*raw["conv1"])        # (Cout, k*k*Cin) bf16, (Cout,1) f32
    w2, b2 = _fold_bn(*raw["conv2"])        # (Cout, k*k*Cout)
    wr, br = _fold_bn(*raw["resampler"])    # (Cout, Cin)
    Cout = w1.shape[0]

    x_flat = x_nchw.reshape(N, Cin, HW)     # NCHW with spatial flattened (lane dim)
    masks = _tap_masks(H, W, k, pad)        # (k*k, HW)

    out = pl.pallas_call(
        _make_fused_kernel(H, W, k, pad),
        out_shape=jax.ShapeDtypeStruct((N, Cout, HW), jnp.float32),
        grid=(N,),
        in_specs=[
            pl.BlockSpec((1, Cin, HW), lambda n: (n, 0, 0)),       # x (per batch)
            pl.BlockSpec((k * k, HW), lambda n: (0, 0)),           # tap masks
            pl.BlockSpec((Cout, k * k * Cin), lambda n: (0, 0)),   # w1 (BN-folded)
            pl.BlockSpec((Cout, 1), lambda n: (0, 0)),             # b1
            pl.BlockSpec((Cout, k * k * Cout), lambda n: (0, 0)),  # w2
            pl.BlockSpec((Cout, 1), lambda n: (0, 0)),             # b2
            pl.BlockSpec((Cout, Cin), lambda n: (0, 0)),           # wr (1x1 resampler)
            pl.BlockSpec((Cout, 1), lambda n: (0, 0)),             # br
        ],
        out_specs=pl.BlockSpec((1, Cout, HW), lambda n: (n, 0, 0)),
        compiler_params=pltpu.CompilerParams(dimension_semantics=("parallel",)),
    )(x_flat, masks, w1, b1, w2, b2, wr, br)

    # (N, Cout, HW) is already NCHW-ordered: only un-flatten the spatial dims.
    # TODO(synk): do_pool=True branch (MaxPool2d / AvgPool2d) not implemented; module default do_pool=False.
    # TODO(synk): for much larger H*W/Cin, tile HW across the grid with k-1 halos to fit v7x's 64 MiB VMEM.
    return out.reshape(N, Cout, H, W)


# ---------------------------------------------------------------------------
# Deterministic parameter init + pure-JAX f32 reference for validation
# ---------------------------------------------------------------------------
def init_raw_params(key, in_channels, out_channels, k):
    def conv_bn_params(key, cin, cout, ksz):
        ks = jax.random.split(key, 6)
        w = 0.1 * jax.random.normal(ks[0], (cout, cin, ksz, ksz), jnp.float32)
        b = 0.05 * jax.random.normal(ks[1], (cout,), jnp.float32)
        gamma = 1.0 + 0.1 * jax.random.normal(ks[2], (cout,), jnp.float32)
        beta = 0.1 * jax.random.normal(ks[3], (cout,), jnp.float32)
        mean = 0.1 * jax.random.normal(ks[4], (cout,), jnp.float32)
        var = 1.0 + 0.1 * jnp.abs(jax.random.normal(ks[5], (cout,), jnp.float32))
        return (w, b, gamma, beta, mean, var)

    k1, k2, k3 = jax.random.split(key, 3)
    return {
        "conv1": conv_bn_params(k1, in_channels, out_channels, k),
        "conv2": conv_bn_params(k2, out_channels, out_channels, k),
        "resampler": conv_bn_params(k3, in_channels, out_channels, 1),
    }


def reference_forward(x_nchw, raw, k):
    def conv_bn(x, w, b, gamma, beta, mean, var):
        ksz = w.shape[-1]
        pad = [((ksz - 1) // 2, (ksz - 1) - (ksz - 1) // 2)] * 2
        y = jax.lax.conv_general_dilated(
            x, w, window_strides=(1, 1), padding=pad,
            dimension_numbers=("NCHW", "OIHW", "NCHW"))
        y = y + b[None, :, None, None]
        y = (y - mean[None, :, None, None]) / jnp.sqrt(var + BN_EPS)[None, :, None, None]
        return y * gamma[None, :, None, None] + beta[None, :, None, None]

    def lrelu(v):
        return jnp.where(v >= 0.0, v, NEG_SLOPE * v)

    o = lrelu(conv_bn(x_nchw, *raw["conv1"]))
    o = conv_bn(o, *raw["conv2"])
    res = conv_bn(x_nchw, *raw["resampler"])
    return lrelu(o + res)


if __name__ == "__main__":
    in_channels, out_channels, k = 4, 8, 4
    N, H, W = 2, 16, 16

    key = jax.random.PRNGKey(0)
    kx, kp = jax.random.split(key)
    x = jax.random.normal(kx, (N, in_channels, H, W), jnp.float32)
    raw = init_raw_params(kp, in_channels, out_channels, k)

    fwd = jax.jit(seed_deep_layer_forward, static_argnums=2)
    out = jax.block_until_ready(fwd(x, raw, k))
    assert out.shape == (N, out_channels, H, W), out.shape

    ref = reference_forward(x, raw, k)
    max_err = float(jnp.max(jnp.abs(out - ref)))
    # bf16 MXU matmuls (f32 accumulation) vs the all-f32 reference: ~1e-2-level
    # absolute error is expected; a real indexing/mask bug would be O(1).
    if max_err > 5e-2:
        raise AssertionError(f"Pallas output mismatch vs reference: max abs err = {max_err}")

    print("KERNEL_OK")
</pallas_src>

<mosaic_0001>
module attributes {stable_mosaic.version = 11 : i64} {
  func.func @kernel(%arg0: i32, %arg1: memref<1x4x256xf32, #tpu.memory_space<vmem>>, %arg2: memref<16x256xf32, #tpu.memory_space<vmem>>, %arg3: memref<8x64xbf16, #tpu.memory_space<vmem>>, %arg4: memref<8x1xf32, #tpu.memory_space<vmem>>, %arg5: memref<8x128xbf16, #tpu.memory_space<vmem>>, %arg6: memref<8x1xf32, #tpu.memory_space<vmem>>, %arg7: memref<8x4xbf16, #tpu.memory_space<vmem>>, %arg8: memref<8x1xf32, #tpu.memory_space<vmem>>, %arg9: memref<1x8x256xf32, #tpu.memory_space<vmem>>) attributes {dimension_semantics = [#tpu.dimension_semantics<parallel>], iteration_bounds = array<i64: 2>, scalar_prefetch = 0 : i64, scratch_operands = 0 : i64, tpu.core_type = #tpu.core_type<tc>, window_params = [{transform_indices = @transform_0, window_bounds = array<i64: 1, 4, 256>}, {pipeline_mode = #tpu.pipeline_mode<synchronous>, transform_indices = @transform_1, window_bounds = array<i64: 16, 256>}, {pipeline_mode = #tpu.pipeline_mode<synchronous>, transform_indices = @transform_2, window_bounds = array<i64: 8, 64>}, {pipeline_mode = #tpu.pipeline_mode<synchronous>, transform_indices = @transform_3, window_bounds = array<i64: 8, 1>}, {pipeline_mode = #tpu.pipeline_mode<synchronous>, transform_indices = @transform_4, window_bounds = array<i64: 8, 128>}, {pipeline_mode = #tpu.pipeline_mode<synchronous>, transform_indices = @transform_5, window_bounds = array<i64: 8, 1>}, {pipeline_mode = #tpu.pipeline_mode<synchronous>, transform_indices = @transform_6, window_bounds = array<i64: 8, 4>}, {pipeline_mode = #tpu.pipeline_mode<synchronous>, transform_indices = @transform_7, window_bounds = array<i64: 8, 1>}, {transform_indices = @transform_8, window_bounds = array<i64: 1, 8, 256>}]} {
    %c0 = arith.constant 0 : index
    %c0_0 = arith.constant 0 : index
    %0 = vector.load %arg2[%c0, %c0_0] : memref<16x256xf32, #tpu.memory_space<vmem>>, vector<16x256xf32>
    %c0_1 = arith.constant 0 : index
    %c0_2 = arith.constant 0 : index
    %c0_3 = arith.constant 0 : index
    %1 = vector.load %arg1[%c0_1, %c0_2, %c0_3] : memref<1x4x256xf32, #tpu.memory_space<vmem>>, vector<1x4x256xf32>
    %2 = vector.shape_cast %1 : vector<1x4x256xf32> to vector<4x256xf32>
    %c0_4 = arith.constant 0 : index
    %c0_5 = arith.constant 0 : index
    %3 = vector.load %arg3[%c0_4, %c0_5] : memref<8x64xbf16, #tpu.memory_space<vmem>>, vector<8x64xbf16>
    %c17_i32 = arith.constant 17 : i32
    %4 = tpu.dynamic_rotate %2 by %c17_i32 dim 1 : vector<4x256xf32>, i32 -> vector<4x256xf32>
    %5 = vector.extract_strided_slice %0 {offsets = [0, 0], sizes = [1, 256], strides = [1, 1]} : vector<16x256xf32> to vector<1x256xf32>
    %6 = vector.broadcast %5 : vector<1x256xf32> to vector<4x256xf32>
    %7 = arith.mulf %4, %6 : vector<4x256xf32>
    %c16_i32 = arith.constant 16 : i32
    %8 = tpu.dynamic_rotate %2 by %c16_i32 dim 1 : vector<4x256xf32>, i32 -> vector<4x256xf32>
    %9 = vector.extract_strided_slice %0 {offsets = [1, 0], sizes = [1, 256], strides = [1, 1]} : vector<16x256xf32> to vector<1x256xf32>
    %10 = vector.broadcast %9 : vector<1x256xf32> to vector<4x256xf32>
    %11 = arith.mulf %8, %10 : vector<4x256xf32>
    %c15_i32 = arith.constant 15 : i32
    %12 = tpu.dynamic_rotate %2 by %c15_i32 dim 1 : vector<4x256xf32>, i32 -> vector<4x256xf32>
    %13 = vector.extract_strided_slice %0 {offsets = [2, 0], sizes = [1, 256], strides = [1, 1]} : vector<16x256xf32> to vector<1x256xf32>
    %14 = vector.broadcast %13 : vector<1x256xf32> to vector<4x256xf32>
    %15 = arith.mulf %12, %14 : vector<4x256xf32>
    %c14_i32 = arith.constant 14 : i32
    %16 = tpu.dynamic_rotate %2 by %c14_i32 dim 1 : vector<4x256xf32>, i32 -> vector<4x256xf32>
    %17 = vector.extract_strided_slice %0 {offsets = [3, 0], sizes = [1, 256], strides = [1, 1]} : vector<16x256xf32> to vector<1x256xf32>
    %18 = vector.broadcast %17 : vector<1x256xf32> to vector<4x256xf32>
    %19 = arith.mulf %16, %18 : vector<4x256xf32>
    %c1_i32 = arith.constant 1 : i32
    %20 = tpu.dynamic_rotate %2 by %c1_i32 dim 1 : vector<4x256xf32>, i32 -> vector<4x256xf32>
    %21 = vector.extract_strided_slice %0 {offsets = [4, 0], sizes = [1, 256], strides = [1, 1]} : vector<16x256xf32> to vector<1x256xf32>
    %22 = vector.broadcast %21 : vector<1x256xf32> to vector<4x256xf32>
    %23 = arith.mulf %20, %22 : vector<4x256xf32>
    %c255_i32 = arith.constant 255 : i32
    %24 = tpu.dynamic_rotate %2 by %c255_i32 dim 1 : vector<4x256xf32>, i32 -> vector<4x256xf32>
    %25 = vector.extract_strided_slice %0 {offsets = [6, 0], sizes = [1, 256], strides = [1, 1]} : vector<16x256xf32> to vector<1x256xf32>
    %26 = vector.broadcast %25 : vector<1x256xf32> to vector<4x256xf32>
    %27 = arith.mulf %24, %26 : vector<4x256xf32>
    %c254_i32 = arith.constant 254 : i32
    %28 = tpu.dynamic_rotate %2 by %c254_i32 dim 1 : vector<4x256xf32>, i32 -> vector<4x256xf32>
    %29 = vector.extract_strided_slice %0 {offsets = [7, 0], sizes = [1, 256], strides = [1, 1]} : vector<16x256xf32> to vector<1x256xf32>
    %30 = vector.broadcast %29 : vector<1x256xf32> to vector<4x256xf32>
    %31 = arith.mulf %28, %30 : vector<4x256xf32>
    %c241_i32 = arith.constant 241 : i32
    %32 = tpu.dynamic_rotate %2 by %c241_i32 dim 1 : vector<4x256xf32>, i32 -> vector<4x256xf32>
    %33 = vector.extract_strided_slice %0 {offsets = [8, 0], sizes = [1, 256], strides = [1, 1]} : vector<16x256xf32> to vector<1x256xf32>
    %34 = vector.broadcast %33 : vector<1x256xf32> to vector<4x256xf32>
    %35 = arith.mulf %32, %34 : vector<4x256xf32>
    %c240_i32 = arith.constant 240 : i32
    %36 = tpu.dynamic_rotate %2 by %c240_i32 dim 1 : vector<4x256xf32>, i32 -> vector<4x256xf32>
    %37 = vector.extract_strided_slice %0 {offsets = [9, 0], sizes = [1, 256], strides = [1, 1]} : vector<16x256xf32> to vector<1x256xf32>
    %38 = vector.broadcast %37 : vector<1x256xf32> to vector<4x256xf32>
    %39 = arith.mulf %36, %38 : vector<4x256xf32>
    %c239_i32 = arith.constant 239 : i32
    %40 = tpu.dynamic_rotate %2 by %c239_i32 dim 1 : vector<4x256xf32>, i32 -> vector<4x256xf32>
    %41 = vector.extract_strided_slice %0 {offsets = [10, 0], sizes = [1, 256], strides = [1, 1]} : vector<16x256xf32> to vector<1x256xf32>
    %42 = vector.broadcast %41 : vector<1x256xf32> to vector<4x256xf32>
    %43 = arith.mulf %40, %42 : vector<4x256xf32>
    %c238_i32 = arith.constant 238 : i32
    %44 = tpu.dynamic_rotate %2 by %c238_i32 dim 1 : vector<4x256xf32>, i32 -> vector<4x256xf32>
    %45 = vector.extract_strided_slice %0 {offsets = [11, 0], sizes = [1, 256], strides = [1, 1]} : vector<16x256xf32> to vector<1x256xf32>
    %46 = vector.broadcast %45 : vector<1x256xf32> to vector<4x256xf32>
    %47 = arith.mulf %44, %46 : vector<4x256xf32>
    %c225_i32 = arith.constant 225 : i32
    %48 = tpu.dynamic_rotate %2 by %c225_i32 dim 1 : vector<4x256xf32>, i32 -> vector<4x256xf32>
    %49 = vector.extract_strided_slice %0 {offsets = [12, 0], sizes = [1, 256], strides = [1, 1]} : vector<16x256xf32> to vector<1x256xf32>
    %50 = vector.broadcast %49 : vector<1x256xf32> to vector<4x256xf32>
    %51 = arith.mulf %48, %50 : vector<4x256xf32>
    %c224_i32 = arith.constant 224 : i32
    %52 = tpu.dynamic_rotate %2 by %c224_i32 dim 1 : vector<4x256xf32>, i32 -> vector<4x256xf32>
    %53 = vector.extract_strided_slice %0 {offsets = [13, 0], sizes = [1, 256], strides = [1, 1]} : vector<16x256xf32> to vector<1x256xf32>
    %54 = vector.broadcast %53 : vector<1x256xf32> to vector<4x256xf32>
    %55 = arith.mulf %52, %54 : vector<4x256xf32>
    %c223_i32 = arith.constant 223 : i32
    %56 = tpu.dynamic_rotate %2 by %c223_i32 dim 1 : vector<4x256xf32>, i32 -> vector<4x256xf32>
    %57 = vector.extract_strided_slice %0 {offsets = [14, 0], sizes = [1, 256], strides = [1, 1]} : vector<16x256xf32> to vector<1x256xf32>
    %58 = vector.broadcast %57 : vector<1x256xf32> to vector<4x256xf32>
    %59 = arith.mulf %56, %58 : vector<4x256xf32>
    %c222_i32 = arith.constant 222 : i32
    %60 = tpu.dynamic_rotate %2 by %c222_i32 dim 1 : vector<4x256xf32>, i32 -> vector<4x256xf32>
    %61 = vector.extract_strided_slice %0 {offsets = [15, 0], sizes = [1, 256], strides = [1, 1]} : vector<16x256xf32> to vector<1x256xf32>
    %62 = vector.broadcast %61 : vector<1x256xf32> to vector<4x256xf32>
    %63 = arith.mulf %60, %62 : vector<4x256xf32>
    %64 = tpu.concatenate %7, %11, %15, %19, %23, %2, %27, %31, %35, %39, %43, %47, %51, %55, %59, %63 in 0 : vector<4x256xf32>, vector<4x256xf32>, vector<4x256xf32>, vector<4x256xf32>, vector<4x256xf32>, vector<4x256xf32>, vector<4x256xf32>, vector<4x256xf32>, vector<4x256xf32>, vector<4x256xf32>, vector<4x256xf32>, vector<4x256xf32>, vector<4x256xf32>, vector<4x256xf32>, vector<4x256xf32>, vector<4x256xf32> -> vector<64x256xf32>
    %65 = arith.truncf %64 : vector<64x256xf32> to vector<64x256xbf16>
    %cst = arith.constant dense<0.000000e+00> : vector<8x256xf32>
    %66 = tpu.matmul %3, %65, %cst {dimension_numbers = #tpu.dot_dimension_numbers<[1], [0], [0], [1], [0, 0, 1, 1], [], []>} : vector<8x64xbf16>, vector<64x256xbf16>, vector<8x256xf32> -> vector<8x256xf32>
    %c0_6 = arith.constant 0 : index
    %c0_7 = arith.constant 0 : index
    %67 = vector.load %arg4[%c0_6, %c0_7] : memref<8x1xf32, #tpu.memory_space<vmem>>, vector<8x1xf32>
    %68 = vector.broadcast %67 : vector<8x1xf32> to vector<8x256xf32>
    %69 = arith.addf %66, %68 : vector<8x256xf32>
    %cst_8 = arith.constant 0.000000e+00 : f32
    %70 = vector.broadcast %cst_8 : f32 to vector<8x256xf32>
    %71 = arith.cmpf oge, %69, %70 : vector<8x256xf32>
    %cst_9 = arith.constant 0.00999999977 : f32
    %72 = vector.broadcast %cst_9 : f32 to vector<8x256xf32>
    %73 = arith.mulf %72, %69 : vector<8x256xf32>
    %74 = arith.select %71, %69, %73 : vector<8x256xi1>, vector<8x256xf32>
    %c0_10 = arith.constant 0 : index
    %c0_11 = arith.constant 0 : index
    %75 = vector.load %arg5[%c0_10, %c0_11] : memref<8x128xbf16, #tpu.memory_space<vmem>>, vector<8x128xbf16>
    %c17_i32_12 = arith.constant 17 : i32
    %76 = tpu.dynamic_rotate %74 by %c17_i32_12 dim 1 : vector<8x256xf32>, i32 -> vector<8x256xf32>
    %77 = vector.extract_strided_slice %0 {offsets = [0, 0], sizes = [1, 256], strides = [1, 1]} : vector<16x256xf32> to vector<1x256xf32>
    %78 = vector.broadcast %77 : vector<1x256xf32> to vector<8x256xf32>
    %79 = arith.mulf %76, %78 : vector<8x256xf32>
    %c16_i32_13 = arith.constant 16 : i32
    %80 = tpu.dynamic_rotate %74 by %c16_i32_13 dim 1 : vector<8x256xf32>, i32 -> vector<8x256xf32>
    %81 = vector.extract_strided_slice %0 {offsets = [1, 0], sizes = [1, 256], strides = [1, 1]} : vector<16x256xf32> to vector<1x256xf32>
    %82 = vector.broadcast %81 : vector<1x256xf32> to vector<8x256xf32>
    %83 = arith.mulf %80, %82 : vector<8x256xf32>
    %c15_i32_14 = arith.constant 15 : i32
    %84 = tpu.dynamic_rotate %74 by %c15_i32_14 dim 1 : vector<8x256xf32>, i32 -> vector<8x256xf32>
    %85 = vector.extract_strided_slice %0 {offsets = [2, 0], sizes = [1, 256], strides = [1, 1]} : vector<16x256xf32> to vector<1x256xf32>
    %86 = vector.broadcast %85 : vector<1x256xf32> to vector<8x256xf32>
    %87 = arith.mulf %84, %86 : vector<8x256xf32>
    %c14_i32_15 = arith.constant 14 : i32
    %88 = tpu.dynamic_rotate %74 by %c14_i32_15 dim 1 : vector<8x256xf32>, i32 -> vector<8x256xf32>
    %89 = vector.extract_strided_slice %0 {offsets = [3, 0], sizes = [1, 256], strides = [1, 1]} : vector<16x256xf32> to vector<1x256xf32>
    %90 = vector.broadcast %89 : vector<1x256xf32> to vector<8x256xf32>
    %91 = arith.mulf %88, %90 : vector<8x256xf32>
    %c1_i32_16 = arith.constant 1 : i32
    %92 = tpu.dynamic_rotate %74 by %c1_i32_16 dim 1 : vector<8x256xf32>, i32 -> vector<8x256xf32>
    %93 = vector.extract_strided_slice %0 {offsets = [4, 0], sizes = [1, 256], strides = [1, 1]} : vector<16x256xf32> to vector<1x256xf32>
    %94 = vector.broadcast %93 : vector<1x256xf32> to vector<8x256xf32>
    %95 = arith.mulf %92, %94 : vector<8x256xf32>
    %c255_i32_17 = arith.constant 255 : i32
    %96 = tpu.dynamic_rotate %74 by %c255_i32_17 dim 1 : vector<8x256xf32>, i32 -> vector<8x256xf32>
    %97 = vector.extract_strided_slice %0 {offsets = [6, 0], sizes = [1, 256], strides = [1, 1]} : vector<16x256xf32> to vector<1x256xf32>
    %98 = vector.broadcast %97 : vector<1x256xf32> to vector<8x256xf32>
    %99 = arith.mulf %96, %98 : vector<8x256xf32>
    %c254_i32_18 = arith.constant 254 : i32
    %100 = tpu.dynamic_rotate %74 by %c254_i32_18 dim 1 : vector<8x256xf32>, i32 -> vector<8x256xf32>
    %101 = vector.extract_strided_slice %0 {offsets = [7, 0], sizes = [1, 256], strides = [1, 1]} : vector<16x256xf32> to vector<1x256xf32>
    %102 = vector.broadcast %101 : vector<1x256xf32> to vector<8x256xf32>
    %103 = arith.mulf %100, %102 : vector<8x256xf32>
    %c241_i32_19 = arith.constant 241 : i32
    %104 = tpu.dynamic_rotate %74 by %c241_i32_19 dim 1 : vector<8x256xf32>, i32 -> vector<8x256xf32>
    %105 = vector.extract_strided_slice %0 {offsets = [8, 0], sizes = [1, 256], strides = [1, 1]} : vector<16x256xf32> to vector<1x256xf32>
    %106 = vector.broadcast %105 : vector<1x256xf32> to vector<8x256xf32>
    %107 = arith.mulf %104, %106 : vector<8x256xf32>
    %c240_i32_20 = arith.constant 240 : i32
    %108 = tpu.dynamic_rotate %74 by %c240_i32_20 dim 1 : vector<8x256xf32>, i32 -> vector<8x256xf32>
    %109 = vector.extract_strided_slice %0 {offsets = [9, 0], sizes = [1, 256], strides = [1, 1]} : vector<16x256xf32> to vector<1x256xf32>
    %110 = vector.broadcast %109 : vector<1x256xf32> to vector<8x256xf32>
    %111 = arith.mulf %108, %110 : vector<8x256xf32>
    %c239_i32_21 = arith.constant 239 : i32
    %112 = tpu.dynamic_rotate %74 by %c239_i32_21 dim 1 : vector<8x256xf32>, i32 -> vector<8x256xf32>
    %113 = vector.extract_strided_slice %0 {offsets = [10, 0], sizes = [1, 256], strides = [1, 1]} : vector<16x256xf32> to vector<1x256xf32>
    %114 = vector.broadcast %113 : vector<1x256xf32> to vector<8x256xf32>
    %115 = arith.mulf %112, %114 : vector<8x256xf32>
    %c238_i32_22 = arith.constant 238 : i32
    %116 = tpu.dynamic_rotate %74 by %c238_i32_22 dim 1 : vector<8x256xf32>, i32 -> vector<8x256xf32>
    %117 = vector.extract_strided_slice %0 {offsets = [11, 0], sizes = [1, 256], strides = [1, 1]} : vector<16x256xf32> to vector<1x256xf32>
    %118 = vector.broadcast %117 : vector<1x256xf32> to vector<8x256xf32>
    %119 = arith.mulf %116, %118 : vector<8x256xf32>
    %c225_i32_23 = arith.constant 225 : i32
    %120 = tpu.dynamic_rotate %74 by %c225_i32_23 dim 1 : vector<8x256xf32>, i32 -> vector<8x256xf32>
    %121 = vector.extract_strided_slice %0 {offsets = [12, 0], sizes = [1, 256], strides = [1, 1]} : vector<16x256xf32> to vector<1x256xf32>
    %122 = vector.broadcast %121 : vector<1x256xf32> to vector<8x256xf32>
    %123 = arith.mulf %120, %122 : vector<8x256xf32>
    %c224_i32_24 = arith.constant 224 : i32
    %124 = tpu.dynamic_rotate %74 by %c224_i32_24 dim 1 : vector<8x256xf32>, i32 -> vector<8x256xf32>
    %125 = vector.extract_strided_slice %0 {offsets = [13, 0], sizes = [1, 256], strides = [1, 1]} : vector<16x256xf32> to vector<1x256xf32>
    %126 = vector.broadcast %125 : vector<1x256xf32> to vector<8x256xf32>
    %127 = arith.mulf %124, %126 : vector<8x256xf32>
    %c223_i32_25 = arith.constant 223 : i32
    %128 = tpu.dynamic_rotate %74 by %c223_i32_25 dim 1 : vector<8x256xf32>, i32 -> vector<8x256xf32>
    %129 = vector.extract_strided_slice %0 {offsets = [14, 0], sizes = [1, 256], strides = [1, 1]} : vector<16x256xf32> to vector<1x256xf32>
    %130 = vector.broadcast %129 : vector<1x256xf32> to vector<8x256xf32>
    %131 = arith.mulf %128, %130 : vector<8x256xf32>
    %c222_i32_26 = arith.constant 222 : i32
    %132 = tpu.dynamic_rotate %74 by %c222_i32_26 dim 1 : vector<8x256xf32>, i32 -> vector<8x256xf32>
    %133 = vector.extract_strided_slice %0 {offsets = [15, 0], sizes = [1, 256], strides = [1, 1]} : vector<16x256xf32> to vector<1x256xf32>
    %134 = vector.broadcast %133 : vector<1x256xf32> to vector<8x256xf32>
    %135 = arith.mulf %132, %134 : vector<8x256xf32>
    %136 = tpu.concatenate %79, %83, %87, %91, %95, %74, %99, %103, %107, %111, %115, %119, %123, %127, %131, %135 in 0 : vector<8x256xf32>, vector<8x256xf32>, vector<8x256xf32>, vector<8x256xf32>, vector<8x256xf32>, vector<8x256xf32>, vector<8x256xf32>, vector<8x256xf32>, vector<8x256xf32>, vector<8x256xf32>, vector<8x256xf32>, vector<8x256xf32>, vector<8x256xf32>, vector<8x256xf32>, vector<8x256xf32>, vector<8x256xf32> -> vector<128x256xf32>
    %137 = arith.truncf %136 : vector<128x256xf32> to vector<128x256xbf16>
    %cst_27 = arith.constant dense<0.000000e+00> : vector<8x256xf32>
    %138 = tpu.matmul %75, %137, %cst_27 {dimension_numbers = #tpu.dot_dimension_numbers<[1], [0], [0], [1], [0, 0, 1, 1], [], []>} : vector<8x128xbf16>, vector<128x256xbf16>, vector<8x256xf32> -> vector<8x256xf32>
    %c0_28 = arith.constant 0 : index
    %c0_29 = arith.constant 0 : index
    %139 = vector.load %arg6[%c0_28, %c0_29] : memref<8x1xf32, #tpu.memory_space<vmem>>, vector<8x1xf32>
    %140 = vector.broadcast %139 : vector<8x1xf32> to vector<8x256xf32>
    %141 = arith.addf %138, %140 : vector<8x256xf32>
    %c0_30 = arith.constant 0 : index
    %c0_31 = arith.constant 0 : index
    %142 = vector.load %arg7[%c0_30, %c0_31] : memref<8x4xbf16, #tpu.memory_space<vmem>>, vector<8x4xbf16>
    %143 = arith.truncf %2 : vector<4x256xf32> to vector<4x256xbf16>
    %cst_32 = arith.constant dense<0.000000e+00> : vector<8x256xf32>
    %144 = tpu.matmul %142, %143, %cst_32 {dimension_numbers = #tpu.dot_dimension_numbers<[1], [0], [0], [1], [0, 0, 1, 1], [], []>} : vector<8x4xbf16>, vector<4x256xbf16>, vector<8x256xf32> -> vector<8x256xf32>
    %c0_33 = arith.constant 0 : index
    %c0_34 = arith.constant 0 : index
    %145 = vector.load %arg8[%c0_33, %c0_34] : memref<8x1xf32, #tpu.memory_space<vmem>>, vector<8x1xf32>
    %146 = vector.broadcast %145 : vector<8x1xf32> to vector<8x256xf32>
    %147 = arith.addf %144, %146 : vector<8x256xf32>
    %148 = arith.addf %141, %147 : vector<8x256xf32>
    %cst_35 = arith.constant 0.000000e+00 : f32
    %149 = vector.broadcast %cst_35 : f32 to vector<8x256xf32>
    %150 = arith.cmpf oge, %148, %149 : vector<8x256xf32>
    %cst_36 = arith.constant 0.00999999977 : f32
    %151 = vector.broadcast %cst_36 : f32 to vector<8x256xf32>
    %152 = arith.mulf %151, %148 : vector<8x256xf32>
    %153 = arith.select %150, %148, %152 : vector<8x256xi1>, vector<8x256xf32>
    %c0_37 = arith.constant 0 : index
    %c0_38 = arith.constant 0 : index
    %c0_39 = arith.constant 0 : index
    %154 = vector.load %arg9[%c0_37, %c0_38, %c0_39] : memref<1x8x256xf32, #tpu.memory_space<vmem>>, vector<1x8x256xf32>
    %155 = vector.shape_cast %154 : vector<1x8x256xf32> to vector<8x256xf32>
    %156 = vector.shape_cast %153 : vector<8x256xf32> to vector<1x8x256xf32>
    tpu.vector_store %arg9[%c0_37, %c0_38, %c0_39], %156 {strides = array<i32>} : memref<1x8x256xf32, #tpu.memory_space<vmem>>, vector<1x8x256xf32>,
    return
  }
  func.func @transform_0(%arg0: i32) -> (i32, i32, i32) {
    %c0_i32 = arith.constant 0 : i32
    %c0_i32_0 = arith.constant 0 : i32
    %c0_i32_1 = arith.constant 0 : i32
    return %arg0, %c0_i32, %c0_i32_0 : i32, i32, i32
  }
  func.func @transform_1(%arg0: i32) -> (i32, i32) {
    %c0_i32 = arith.constant 0 : i32
    %c0_i32_0 = arith.constant 0 : i32
    %c0_i32_1 = arith.constant 0 : i32
    return %c0_i32, %c0_i32_0 : i32, i32
  }
  func.func @transform_2(%arg0: i32) -> (i32, i32) {
    %c0_i32 = arith.constant 0 : i32
    %c0_i32_0 = arith.constant 0 : i32
    %c0_i32_1 = arith.constant 0 : i32
    return %c0_i32, %c0_i32_0 : i32, i32
  }
  func.func @transform_3(%arg0: i32) -> (i32, i32) {
    %c0_i32 = arith.constant 0 : i32
    %c0_i32_0 = arith.constant 0 : i32
    %c0_i32_1 = arith.constant 0 : i32
    return %c0_i32, %c0_i32_0 : i32, i32
  }
  func.func @transform_4(%arg0: i32) -> (i32, i32) {
    %c0_i32 = arith.constant 0 : i32
    %c0_i32_0 = arith.constant 0 : i32
    %c0_i32_1 = arith.constant 0 : i32
    return %c0_i32, %c0_i32_0 : i32, i32
  }
  func.func @transform_5(%arg0: i32) -> (i32, i32) {
    %c0_i32 = arith.constant 0 : i32
    %c0_i32_0 = arith.constant 0 : i32
    %c0_i32_1 = arith.constant 0 : i32
    return %c0_i32, %c0_i32_0 : i32, i32
  }
  func.func @transform_6(%arg0: i32) -> (i32, i32) {
    %c0_i32 = arith.constant 0 : i32
    %c0_i32_0 = arith.constant 0 : i32
    %c0_i32_1 = arith.constant 0 : i32
    return %c0_i32, %c0_i32_0 : i32, i32
  }
  func.func @transform_7(%arg0: i32) -> (i32, i32) {
    %c0_i32 = arith.constant 0 : i32
    %c0_i32_0 = arith.constant 0 : i32
    %c0_i32_1 = arith.constant 0 : i32
    return %c0_i32, %c0_i32_0 : i32, i32
  }
  func.func @transform_8(%arg0: i32) -> (i32, i32, i32) {
    %c0_i32 = arith.constant 0 : i32
    %c0_i32_0 = arith.constant 0 : i32
    %c0_i32_1 = arith.constant 0 : i32
    return %arg0, %c0_i32, %c0_i32_0 : i32, i32, i32
  }
}

</mosaic_0001>

<llo_original>
// kernel: seed_deep_layer_forward.1
$region0: #{seed_deep_layer_forward.1}
  #allocation0 [shape = 'u32[]', space=smem, size = 0x4, offset = 0x4, fixed_abs, tag = 'smem constant byte address 0x4 - core index']
  #allocation1 [shape = 'u32[144,128]{1,0:T(1,128)}', space=vmem, size = 0x12000, scoped, tag = 'internal scratch']
  %s0 = inlined_call_operand.vmem [shape: f32[2,4,256], index: 0, kind: input, shape index: {}]
  %s1 = inlined_call_operand.vmem [shape: f32[16,256], index: 1, kind: input, shape index: {}]
  %s2 = inlined_call_operand.vmem [shape: bf16[8,64], index: 2, kind: input, shape index: {}]
  %s3 = inlined_call_operand.vmem [shape: f32[8,1], index: 3, kind: input, shape index: {}]
  %s4 = inlined_call_operand.vmem [shape: bf16[8,128], index: 4, kind: input, shape index: {}]
  %s5 = inlined_call_operand.vmem [shape: f32[8,1], index: 5, kind: input, shape index: {}]
  %s6 = inlined_call_operand.vmem [shape: bf16[8,4], index: 6, kind: input, shape index: {}]
  %s7 = inlined_call_operand.vmem [shape: f32[8,1], index: 7, kind: input, shape index: {}]
  %s8 = inlined_call_operand.vmem [shape: f32[2,8,256], index: 8, kind: output, shape index: {}]
  %s9 = sld [smem:[#allocation0]]
  $region65: #{seed_deep_layer_forward.1} parent=0
    _
  %s11 = ssub.s32 1, %s9
  %s12 = scalar_select 0, %s11, %s9
  loop: start=0, step=1, limit=4
  $region2: #{seed_deep_layer_forward.1} parent=0 // loop_pre_header
    _
  $region3: #{seed_deep_layer_forward.1} parent=0 // loop_header
    %s14 = sphi 0, %s18
    %p15 = scmp.ge.s32.totalorder %s14, 4
    %s24 = sphi 0, %s26
    %s27 = sphi 0, %s24
    %s28 = sphi 0, %s27
    %s44 = sphi 0, %s28
    %s48 = sphi 0, %s48
    %s50 = sphi 0, %s48
    %s51 = sphi 0, %s50
    %s65 = sphi 0, %s51
    %s69 = sphi 0, %s69
    %s71 = sphi 0, %s69
    %s72 = sphi 0, %s71
    %s86 = sphi 0, %s72
    %s90 = sphi 0, %s90
    %s92 = sphi 0, %s90
    %s93 = sphi 0, %s92
    %s107 = sphi 0, %s93
    %s111 = sphi 0, %s111
    %s113 = sphi 0, %s111
    %s114 = sphi 0, %s113
    %s128 = sphi 0, %s114
    %s132 = sphi 0, %s132
    %s134 = sphi 0, %s132
    %s135 = sphi 0, %s134
    %s149 = sphi 0, %s135
    %s153 = sphi 0, %s153
    %s155 = sphi 0, %s153
    %s156 = sphi 0, %s155
    %s170 = sphi 0, %s156
    %s174 = sphi 0, %s174
    %s176 = sphi 0, %s174
    %s177 = sphi 0, %s176
    %s191 = sphi 0, %s177
    %s197 = sphi 0, %s199
    %s200 = sphi 0, %s197
    %s201 = sphi 0, %s200
    %s217 = sphi 0, %s201
  $region4: #{seed_deep_layer_forward.1} parent=0 // loop_header_branch
    %17 = sbr.rel (%p15) target = $region8
  $region5: #{seed_deep_layer_forward.1} parent=0 // loop_body
    %s19 = ssub.s32 %s14, 1
    %s20 = ssub.s32 %s14, 2
    %s21 = sadd.s32 %s14, 1
    %s22 = ssub.s32 %s14, %s21
    %p23 = scmp.eq.s32.totalorder %s22, 0
    %s25 = sadd.s32 %s24, 1
    %s26 = scalar_select %p23, %s24, %s25
    %p29 = pneg %p23
    %p30 = scmp.eq.s32.totalorder %s14, 1
    %p31 = por %p29, %p30
    %p32 = scmp.ne.s32.totalorder %s24, %s27
    %p33 = scmp.eq.s32.totalorder %s14, 0
    %p34 = por %p32, %p33
    %p35 = scmp.ne.s32.totalorder %s24, %s27
    %p36 = scmp.eq.s32.totalorder %s19, 1
    %p37 = por %p35, %p36
    %p38 = scmp.ne.s32.totalorder %s27, %s28
    %p39 = scmp.eq.s32.totalorder %s19, 0
    %p40 = por %p38, %p39
    %p41 = scmp.ne.s32.totalorder %s27, %s28
    %p42 = scmp.eq.s32.totalorder %s20, 1
    %p43 = por %p41, %p42
    %p45 = scmp.ne.s32.totalorder %s28, %s44
    %p46 = scmp.eq.s32.totalorder %s20, 0
    %p47 = por %p45, %p46
    %s49 = sadd.s32 %s48, 1
    %p52 = scmp.eq.s32.totalorder %s14, 1
    %p53 = scmp.ne.s32.totalorder %s48, %s50
    %p54 = scmp.eq.s32.totalorder %s14, 0
    %p55 = por %p53, %p54
    %p56 = scmp.ne.s32.totalorder %s48, %s50
    %p57 = scmp.eq.s32.totalorder %s19, 1
    %p58 = por %p56, %p57
    %p59 = scmp.ne.s32.totalorder %s50, %s51
    %p60 = scmp.eq.s32.totalorder %s19, 0
    %p61 = por %p59, %p60
    %p62 = scmp.ne.s32.totalorder %s50, %s51
    %p63 = scmp.eq.s32.totalorder %s20, 1
    %p64 = por %p62, %p63
    %p66 = scmp.ne.s32.totalorder %s51, %s65
    %p67 = scmp.eq.s32.totalorder %s20, 0
    %p68 = por %p66, %p67
    %s70 = sadd.s32 %s69, 1
    %p73 = scmp.eq.s32.totalorder %s14, 1
    %p74 = scmp.ne.s32.totalorder %s69, %s71
    %p75 = scmp.eq.s32.totalorder %s14, 0
    %p76 = por %p74, %p75
    %p77 = scmp.ne.s32.totalorder %s69, %s71
    %p78 = scmp.eq.s32.totalorder %s19, 1
    %p79 = por %p77, %p78
    %p80 = scmp.ne.s32.totalorder %s71, %s72
    %p81 = scmp.eq.s32.totalorder %s19, 0
    %p82 = por %p80, %p81
    %p83 = scmp.ne.s32.totalorder %s71, %s72
    %p84 = scmp.eq.s32.totalorder %s20, 1
    %p85 = por %p83, %p84
    %p87 = scmp.ne.s32.totalorder %s72, %s86
    %p88 = scmp.eq.s32.totalorder %s20, 0
    %p89 = por %p87, %p88
    %s91 = sadd.s32 %s90, 1
    %p94 = scmp.eq.s32.totalorder %s14, 1
    %p95 = scmp.ne.s32.totalorder %s90, %s92
    %p96 = scmp.eq.s32.totalorder %s14, 0
    %p97 = por %p95, %p96
    %p98 = scmp.ne.s32.totalorder %s90, %s92
    %p99 = scmp.eq.s32.totalorder %s19, 1
    %p100 = por %p98, %p99
    %p101 = scmp.ne.s32.totalorder %s92, %s93
    %p102 = scmp.eq.s32.totalorder %s19, 0
    %p103 = por %p101, %p102
    %p104 = scmp.ne.s32.totalorder %s92, %s93
    %p105 = scmp.eq.s32.totalorder %s20, 1
    %p106 = por %p104, %p105
    %p108 = scmp.ne.s32.totalorder %s93, %s107
    %p109 = scmp.eq.s32.totalorder %s20, 0
    %p110 = por %p108, %p109
    %s112 = sadd.s32 %s111, 1
    %p115 = scmp.eq.s32.totalorder %s14, 1
    %p116 = scmp.ne.s32.totalorder %s111, %s113
    %p117 = scmp.eq.s32.totalorder %s14, 0
    %p118 = por %p116, %p117
    %p119 = scmp.ne.s32.totalorder %s111, %s113
    %p120 = scmp.eq.s32.totalorder %s19, 1
    %p121 = por %p119, %p120
    %p122 = scmp.ne.s32.totalorder %s113, %s114
    %p123 = scmp.eq.s32.totalorder %s19, 0
    %p124 = por %p122, %p123
    %p125 = scmp.ne.s32.totalorder %s113, %s114
    %p126 = scmp.eq.s32.totalorder %s20, 1
    %p127 = por %p125, %p126
    %p129 = scmp.ne.s32.totalorder %s114, %s128
    %p130 = scmp.eq.s32.totalorder %s20, 0
    %p131 = por %p129, %p130
    %s133 = sadd.s32 %s132, 1
    %p136 = scmp.eq.s32.totalorder %s14, 1
    %p137 = scmp.ne.s32.totalorder %s132, %s134
    %p138 = scmp.eq.s32.totalorder %s14, 0
    %p139 = por %p137, %p138
    %p140 = scmp.ne.s32.totalorder %s132, %s134
    %p141 = scmp.eq.s32.totalorder %s19, 1
    %p142 = por %p140, %p141
    %p143 = scmp.ne.s32.totalorder %s134, %s135
    %p144 = scmp.eq.s32.totalorder %s19, 0
    %p145 = por %p143, %p144
    %p146 = scmp.ne.s32.totalorder %s134, %s135
    %p147 = scmp.eq.s32.totalorder %s20, 1
    %p148 = por %p146, %p147
    %p150 = scmp.ne.s32.totalorder %s135, %s149
    %p151 = scmp.eq.s32.totalorder %s20, 0
    %p152 = por %p150, %p151
    %s154 = sadd.s32 %s153, 1
    %p157 = scmp.eq.s32.totalorder %s14, 1
    %p158 = scmp.ne.s32.totalorder %s153, %s155
    %p159 = scmp.eq.s32.totalorder %s14, 0
    %p160 = por %p158, %p159
    %p161 = scmp.ne.s32.totalorder %s153, %s155
    %p162 = scmp.eq.s32.totalorder %s19, 1
    %p163 = por %p161, %p162
    %p164 = scmp.ne.s32.totalorder %s155, %s156
    %p165 = scmp.eq.s32.totalorder %s19, 0
    %p166 = por %p164, %p165
    %p167 = scmp.ne.s32.totalorder %s155, %s156
    %p168 = scmp.eq.s32.totalorder %s20, 1
    %p169 = por %p167, %p168
    %p171 = scmp.ne.s32.totalorder %s156, %s170
    %p172 = scmp.eq.s32.totalorder %s20, 0
    %p173 = por %p171, %p172
    %s175 = sadd.s32 %s174, 1
    %p178 = scmp.eq.s32.totalorder %s14, 1
    %p179 = scmp.ne.s32.totalorder %s174, %s176
    %p180 = scmp.eq.s32.totalorder %s14, 0
    %p181 = por %p179, %p180
    %p182 = scmp.ne.s32.totalorder %s174, %s176
    %p183 = scmp.eq.s32.totalorder %s19, 1
    %p184 = por %p182, %p183
    %p185 = scmp.ne.s32.totalorder %s176, %s177
    %p186 = scmp.eq.s32.totalorder %s19, 0
    %p187 = por %p185, %p186
    %p188 = scmp.ne.s32.totalorder %s176, %s177
    %p189 = scmp.eq.s32.totalorder %s20, 1
    %p190 = por %p188, %p189
    %p192 = scmp.ne.s32.totalorder %s177, %s191
    %p193 = scmp.eq.s32.totalorder %s20, 0
    %p194 = por %p192, %p193
    %s195 = ssub.s32 %s14, %s21
    %p196 = scmp.eq.s32.totalorder %s195, 0
    %s198 = sadd.s32 %s197, 1
    %s199 = scalar_select %p196, %s197, %s198
    %p202 = pneg %p196
    %p203 = scmp.eq.s32.totalorder %s14, 1
    %p204 = por %p202, %p203
    %p205 = scmp.ne.s32.totalorder %s197, %s200
    %p206 = scmp.eq.s32.totalorder %s14, 0
    %p207 = por %p205, %p206
    %p208 = scmp.ne.s32.totalorder %s197, %s200
    %p209 = scmp.eq.s32.totalorder %s19, 1
    %p210 = por %p208, %p209
    %p211 = scmp.ne.s32.totalorder %s200, %s201
    %p212 = scmp.eq.s32.totalorder %s19, 0
    %p213 = por %p211, %p212
    %p214 = scmp.ne.s32.totalorder %s200, %s201
    %p215 = scmp.eq.s32.totalorder %s20, 1
    %p216 = por %p214, %p215
    %p218 = scmp.ne.s32.totalorder %s201, %s217
    %p219 = scmp.eq.s32.totalorder %s20, 0
    %p220 = por %p218, %p219
    %p221 = scmp.le.s32.totalorder 1, %s14
    %p222 = scmp.lt.s32.totalorder %s14, 3
    %p223 = pnand %p221, %p222
    %p224 = pneg %p223
    // Predicated region
    $region9: #{seed_deep_layer_forward.1} parent=5 // pred_check
      _
    $region10: #{seed_deep_layer_forward.1} parent=5 // pred_check_branch
      %226 = sbr.rel (%p223) target = $region12
    $region11: #{seed_deep_layer_forward.1} parent=5 // pred_region
      %s227 = ssub.s32 %s14, 1
      // Predicated region
      $region13: #{seed_deep_layer_forward.1} parent=11 // pred_check
        %p228 = pneg %p61
      $region14: #{seed_deep_layer_forward.1} parent=11 // pred_check_branch
        %230 = sbr.rel (%p228) target = $region16
      $region15: #{seed_deep_layer_forward.1} parent=11 // pred_region
        _
      $region16: #{seed_deep_layer_forward.1} parent=11 // pred_fallthru
        _
      // Predicated region
      $region17: #{seed_deep_layer_forward.1} parent=11 // pred_check
        %p231 = pneg %p82
      $region18: #{seed_deep_layer_forward.1} parent=11 // pred_check_branch
        %233 = sbr.rel (%p231) target = $region20
      $region19: #{seed_deep_layer_forward.1} parent=11 // pred_region
        _
      $region20: #{seed_deep_layer_forward.1} parent=11 // pred_fallthru
        _
      // Predicated region
      $region21: #{seed_deep_layer_forward.1} parent=11 // pred_check
        %p234 = pneg %p103
      $region22: #{seed_deep_layer_forward.1} parent=11 // pred_check_branch
        %236 = sbr.rel (%p234) target = $region24
      $region23: #{seed_deep_layer_forward.1} parent=11 // pred_region
        _
      $region24: #{seed_deep_layer_forward.1} parent=11 // pred_fallthru
        _
      // Predicated region
      $region25: #{seed_deep_layer_forward.1} parent=11 // pred_check
        %p237 = pneg %p124
      $region26: #{seed_deep_layer_forward.1} parent=11 // pred_check_branch
        %239 = sbr.rel (%p237) target = $region28
      $region27: #{seed_deep_layer_forward.1} parent=11 // pred_region
        _
      $region28: #{seed_deep_layer_forward.1} parent=11 // pred_fallthru
        _
      // Predicated region
      $region29: #{seed_deep_layer_forward.1} parent=11 // pred_check
        %p240 = pneg %p145
      $region30: #{seed_deep_layer_forward.1} parent=11 // pred_check_branch
        %242 = sbr.rel (%p240) target = $region32
      $region31: #{seed_deep_layer_forward.1} parent=11 // pred_region
        _
      $region32: #{seed_deep_layer_forward.1} parent=11 // pred_fallthru
        _
      // Predicated region
      $region33: #{seed_deep_layer_forward.1} parent=11 // pred_check
        %p243 = pneg %p166
      $region34: #{seed_deep_layer_forward.1} parent=11 // pred_check_branch
        %245 = sbr.rel (%p243) target = $region36
      $region35: #{seed_deep_layer_forward.1} parent=11 // pred_region
        _
      $region36: #{seed_deep_layer_forward.1} parent=11 // pred_fallthru
        _
      // Predicated region
      $region37: #{seed_deep_layer_forward.1} parent=11 // pred_check
        %p246 = pneg %p187
      $region38: #{seed_deep_layer_forward.1} parent=11 // pred_check_branch
        %248 = sbr.rel (%p246) target = $region40
      $region39: #{seed_deep_layer_forward.1} parent=11 // pred_region
        _
      $region40: #{seed_deep_layer_forward.1} parent=11 // pred_fallthru
        _
    $region12: #{seed_deep_layer_forward.1} parent=5 // pred_fallthru
      _
    %p249 = scmp.lt.s32.totalorder %s14, 2
    // Predicated region
    $region41: #{seed_deep_layer_forward.1} parent=5 // pred_check
      %p250 = pneg %p249
    $region42: #{seed_deep_layer_forward.1} parent=5 // pred_check_branch
      %252 = sbr.rel (%p250) target = $region44
    $region43: #{seed_deep_layer_forward.1} parent=5 // pred_region
      // Predicated region
      $region45: #{seed_deep_layer_forward.1} parent=43 // pred_check
        %p253 = pneg %p34
      $region46: #{seed_deep_layer_forward.1} parent=43 // pred_check_branch
        %255 = sbr.rel (%p253) target = $region48
      $region47: #{seed_deep_layer_forward.1} parent=43 // pred_region
        %p256 = scmp.lt.s32.totalorder %s14, 1
        %s257 = scalar_select %p256, %s14, 1
        %s258 = smul.addr %s257, 2
        %s259 = smul.addr %s258, 4
        %s260 = scalar_lea.vmem %s0, %s259
      $region48: #{seed_deep_layer_forward.1} parent=43 // pred_fallthru
        _
    $region44: #{seed_deep_layer_forward.1} parent=5 // pred_fallthru
      _
    %p261 = scmp.le.s32.totalorder 1, %s14
    %p262 = scmp.lt.s32.totalorder %s14, 3
    %p263 = pnand %p261, %p262
    %p264 = pneg %p263
    // Predicated region
    $region49: #{seed_deep_layer_forward.1} parent=5 // pred_check
      _
    $region50: #{seed_deep_layer_forward.1} parent=5 // pred_check_branch
      %266 = sbr.rel (%p263) target = $region52
    $region51: #{seed_deep_layer_forward.1} parent=5 // pred_region
      %s267 = ssub.s32 %s14, 1
      %p268 = scmp.lt.s32.totalorder %s19, 1
      %s269 = scalar_select %p268, %s19, 1
      %s270 = smul.addr %s269, 2
      %s271 = smul.addr %s270, 4
      %s272 = scalar_lea.vmem %s0, %s271
      %p273 = pneg %p40
      %p274 = pneg %p37
      %p275 = pneg %p61
      %p276 = pneg %p58
      %p277 = pneg %p82
      %p278 = pneg %p79
      %p279 = pneg %p103
      %p280 = pneg %p100
      %p281 = pneg %p124
      %p282 = pneg %p121
      %p283 = pneg %p145
      %p284 = pneg %p142
      %p285 = pneg %p166
      %p286 = pneg %p163
      %p287 = pneg %p187
      %p288 = pneg %p184
      %p289 = pneg %p213
      %p290 = pneg %p210
      %p291 = scmp.lt.s32.totalorder %s19, 1
      %s292 = scalar_select %p291, %s19, 1
      %s293 = smul.addr %s292, 2
      %s294 = smul.addr %s293, 8
      %s295 = scalar_lea.vmem %s8, %s294
      %p296 = scmp.lt.s32.totalorder %s19, 1
      %s297 = scalar_select %p296, %s19, 1
      %s298 = smul.addr %s297, 2
      %s299 = smul.addr %s298, 4
      %s300 = scalar_lea.vmem %s0, %s299
      %p301 = scmp.lt.s32.totalorder %s19, 1
      %s302 = scalar_select %p301, %s19, 1
      %s303 = smul.addr %s302, 2
      %s304 = smul.addr %s303, 8
      %s305 = scalar_lea.vmem %s8, %s304
      %v307 = vld [vmem:[%s1] sm:$0xff]
      %v308 = vld [vmem:[%s1 + $0x8] sm:$0xff]
      %v309 = vld [vmem:[%s1 + $0x10] sm:$0xff]
      %v310 = vld [vmem:[%s1 + $0x18] sm:$0xff]
      %v311 = vld [vmem:[%s300] sm:$0xff]
      %v312 = vld [vmem:[%s2] sm:$0xf]
      %v314 = vcombine.high %v311, %v311
      %316 = vrot.lane.b32.xlu0 %v311, 17
      %v317 = vpop.permute.xlu0 %316
      %318 = vrot.lane.b32.xlu0 %v314, 17
      %v319 = vpop.permute.xlu0 %318
      %v320 = vlaneseq
      %v321 = vand.u32 %v320, 127
      %vm322 = vcmp.lt.s32.totalorder %v321, 17
      %v323 = vsel %vm322, %v317, %v319
      %v324 = vsel %vm322, %v319, %v317
      %v325 = vlaneseq
      %v326 = vshrl.u32 %v325, 7
      %v327 = vsub.s32 0, %v326
      %v328 = vrot.slane %v307, %v327
      %v329 = vlaneseq
      %v330 = vshrl.u32 %v329, 7
      %v331 = vsub.s32 0, %v330
      %v332 = vrot.slane %v308, %v331
      %v333 = vmul.f32 %v324, %v328
      %v334 = vmul.f32 %v323, %v332
      %335 = vrot.lane.b32.xlu0 %v311, 16
      %v336 = vpop.permute.xlu0 %335
      %337 = vrot.lane.b32.xlu0 %v314, 16
      %v338 = vpop.permute.xlu0 %337
      %vm339 = vcmp.lt.s32.totalorder %v321, 16
      %v340 = vsel %vm339, %v336, %v338
      %v341 = vsel %vm339, %v338, %v336
      %v342 = vlaneseq
      %v343 = vshrl.u32 %v342, 7
      %v344 = vsub.s32 1, %v343
      %v345 = vrot.slane %v307, %v344
      %v346 = vlaneseq
      %v347 = vshrl.u32 %v346, 7
      %v348 = vsub.s32 1, %v347
      %v349 = vrot.slane %v308, %v348
      %v350 = vmul.f32 %v341, %v345
      %v351 = vmul.f32 %v340, %v349
      %352 = vrot.lane.b32.xlu0 %v311, 15
      %v353 = vpop.permute.xlu0 %352
      %354 = vrot.lane.b32.xlu0 %v314, 15
      %v355 = vpop.permute.xlu0 %354
      %vm356 = vcmp.lt.s32.totalorder %v321, 15
      %v357 = vsel %vm356, %v353, %v355
      %v358 = vsel %vm356, %v355, %v353
      %v359 = vlaneseq
      %v360 = vshrl.u32 %v359, 7
      %v361 = vsub.s32 2, %v360
      %v362 = vrot.slane %v307, %v361
      %v363 = vlaneseq
      %v364 = vshrl.u32 %v363, 7
      %v365 = vsub.s32 2, %v364
      %v366 = vrot.slane %v308, %v365
      %v367 = vmul.f32 %v358, %v362
      %v368 = vmul.f32 %v357, %v366
      %369 = vrot.lane.b32.xlu0 %v311, 14
      %v370 = vpop.permute.xlu0 %369
      %371 = vrot.lane.b32.xlu0 %v314, 14
      %v372 = vpop.permute.xlu0 %371
      %vm373 = vcmp.lt.s32.totalorder %v321, 14
      %v374 = vsel %vm373, %v370, %v372
      %v375 = vsel %vm373, %v372, %v370
      %v376 = vlaneseq
      %v377 = vshrl.u32 %v376, 7
      %v378 = vsub.s32 3, %v377
      %v379 = vrot.slane %v307, %v378
      %v380 = vlaneseq
      %v381 = vshrl.u32 %v380, 7
      %v382 = vsub.s32 3, %v381
      %v383 = vrot.slane %v308, %v382
      %v384 = vmul.f32 %v375, %v379
      %v385 = vmul.f32 %v374, %v383
      %386 = vrot.lane.b32.xlu0 %v311, 1
      %v387 = vpop.permute.xlu0 %386
      %388 = vrot.lane.b32.xlu0 %v314, 1
      %v389 = vpop.permute.xlu0 %388
      %vm390 = vcmp.lt.s32.totalorder %v321, 1
      %v391 = vsel %vm390, %v387, %v389
      %v392 = vsel %vm390, %v389, %v387
      %v393 = vlaneseq
      %v394 = vshrl.u32 %v393, 7
      %v395 = vsub.s32 4, %v394
      %v396 = vrot.slane %v307, %v395
      %v397 = vlaneseq
      %v398 = vshrl.u32 %v397, 7
      %v399 = vsub.s32 4, %v398
      %v400 = vrot.slane %v308, %v399
      %v401 = vmul.f32 %v392, %v396
      %v402 = vmul.f32 %v391, %v400
      %403 = vrot.lane.b32.xlu0 %v311, 127
      %v404 = vpop.permute.xlu0 %403
      %405 = vrot.lane.b32.xlu0 %v314, 127
      %v406 = vpop.permute.xlu0 %405
      %vm407 = vcmp.lt.s32.totalorder %v321, 127
      %v408 = vsel %vm407, %v404, %v406
      %v409 = vsel %vm407, %v406, %v404
      %v410 = vlaneseq
      %v411 = vshrl.u32 %v410, 7
      %v412 = vsub.s32 6, %v411
      %v413 = vrot.slane %v307, %v412
      %v414 = vlaneseq
      %v415 = vshrl.u32 %v414, 7
      %v416 = vsub.s32 6, %v415
      %v417 = vrot.slane %v308, %v416
      %v418 = vmul.f32 %v408, %v413
      %v419 = vmul.f32 %v409, %v417
      %420 = vrot.lane.b32.xlu0 %v311, 126
      %v421 = vpop.permute.xlu0 %420
      %422 = vrot.lane.b32.xlu0 %v314, 126
      %v423 = vpop.permute.xlu0 %422
      %vm424 = vcmp.lt.s32.totalorder %v321, 126
      %v425 = vsel %vm424, %v421, %v423
      %v426 = vsel %vm424, %v423, %v421
      %v427 = vlaneseq
      %v428 = vshrl.u32 %v427, 7
      %v429 = vsub.s32 7, %v428
      %v430 = vrot.slane %v307, %v429
      %v431 = vlaneseq
      %v432 = vshrl.u32 %v431, 7
      %v433 = vsub.s32 7, %v432
      %v434 = vrot.slane %v308, %v433
      %v435 = vmul.f32 %v425, %v430
      %v436 = vmul.f32 %v426, %v434
      %437 = vrot.lane.b32.xlu0 %v311, 113
      %v438 = vpop.permute.xlu0 %437
      %439 = vrot.lane.b32.xlu0 %v314, 113
      %v440 = vpop.permute.xlu0 %439
      %vm441 = vcmp.lt.s32.totalorder %v321, 113
      %v442 = vsel %vm441, %v438, %v440
      %v443 = vsel %vm441, %v440, %v438
      %v444 = vlaneseq
      %v445 = vshrl.u32 %v444, 7
      %v446 = vsub.s32 0, %v445
      %v447 = vrot.slane %v309, %v446
      %v448 = vlaneseq
      %v449 = vshrl.u32 %v448, 7
      %v450 = vsub.s32 0, %v449
      %v451 = vrot.slane %v310, %v450
      %v452 = vmul.f32 %v442, %v447
      %v453 = vmul.f32 %v443, %v451
      %454 = vrot.lane.b32.xlu0 %v311, 112
      %v455 = vpop.permute.xlu0 %454
      %456 = vrot.lane.b32.xlu0 %v314, 112
      %v457 = vpop.permute.xlu0 %456
      %vm458 = vcmp.lt.s32.totalorder %v321, 112
      %v459 = vsel %vm458, %v455, %v457
      %v460 = vsel %vm458, %v457, %v455
      %v461 = vlaneseq
      %v462 = vshrl.u32 %v461, 7
      %v463 = vsub.s32 1, %v462
      %v464 = vrot.slane %v309, %v463
      %v465 = vlaneseq
      %v466 = vshrl.u32 %v465, 7
      %v467 = vsub.s32 1, %v466
      %v468 = vrot.slane %v310, %v467
      %v469 = vmul.f32 %v459, %v464
      %v470 = vmul.f32 %v460, %v468
      %471 = vrot.lane.b32.xlu0 %v311, 111
      %v472 = vpop.permute.xlu0 %471
      %473 = vrot.lane.b32.xlu0 %v314, 111
      %v474 = vpop.permute.xlu0 %473
      %vm475 = vcmp.lt.s32.totalorder %v321, 111
      %v476 = vsel %vm475, %v472, %v474
      %v477 = vsel %vm475, %v474, %v472
      %v478 = vlaneseq
      %v479 = vshrl.u32 %v478, 7
      %v480 = vsub.s32 2, %v479
      %v481 = vrot.slane %v309, %v480
      %v482 = vlaneseq
      %v483 = vshrl.u32 %v482, 7
      %v484 = vsub.s32 2, %v483
      %v485 = vrot.slane %v310, %v484
      %v486 = vmul.f32 %v476, %v481
      %v487 = vmul.f32 %v477, %v485
      %488 = vrot.lane.b32.xlu0 %v311, 110
      %v489 = vpop.permute.xlu0 %488
      %490 = vrot.lane.b32.xlu0 %v314, 110
      %v491 = vpop.permute.xlu0 %490
      %vm492 = vcmp.lt.s32.totalorder %v321, 110
      %v493 = vsel %vm492, %v489, %v491
      %v494 = vsel %vm492, %v491, %v489
      %v495 = vlaneseq
      %v496 = vshrl.u32 %v495, 7
      %v497 = vsub.s32 3, %v496
      %v498 = vrot.slane %v309, %v497
      %v499 = vlaneseq
      %v500 = vshrl.u32 %v499, 7
      %v501 = vsub.s32 3, %v500
      %v502 = vrot.slane %v310, %v501
      %v503 = vmul.f32 %v493, %v498
      %v504 = vmul.f32 %v494, %v502
      %505 = vrot.lane.b32.xlu0 %v311, 97
      %v506 = vpop.permute.xlu0 %505
      %507 = vrot.lane.b32.xlu0 %v314, 97
      %v508 = vpop.permute.xlu0 %507
      %vm509 = vcmp.lt.s32.totalorder %v321, 97
      %v510 = vsel %vm509, %v506, %v508
      %v511 = vsel %vm509, %v508, %v506
      %v512 = vlaneseq
      %v513 = vshrl.u32 %v512, 7
      %v514 = vsub.s32 4, %v513
      %v515 = vrot.slane %v309, %v514
      %v516 = vlaneseq
      %v517 = vshrl.u32 %v516, 7
      %v518 = vsub.s32 4, %v517
      %v519 = vrot.slane %v310, %v518
      %v520 = vmul.f32 %v510, %v515
      %v521 = vmul.f32 %v511, %v519
      %522 = vrot.lane.b32.xlu0 %v311, 96
      %v523 = vpop.permute.xlu0 %522
      %524 = vrot.lane.b32.xlu0 %v314, 96
      %v525 = vpop.permute.xlu0 %524
      %vm526 = vcmp.lt.s32.totalorder %v321, 96
      %v527 = vsel %vm526, %v523, %v525
      %v528 = vsel %vm526, %v525, %v523
      %v529 = vlaneseq
      %v530 = vshrl.u32 %v529, 7
      %v531 = vsub.s32 5, %v530
      %v532 = vrot.slane %v309, %v531
      %v533 = vlaneseq
      %v534 = vshrl.u32 %v533, 7
      %v535 = vsub.s32 5, %v534
      %v536 = vrot.slane %v310, %v535
      %v537 = vmul.f32 %v527, %v532
      %v538 = vmul.f32 %v528, %v536
      %539 = vrot.lane.b32.xlu0 %v311, 95
      %v540 = vpop.permute.xlu0 %539
      %541 = vrot.lane.b32.xlu0 %v314, 95
      %v542 = vpop.permute.xlu0 %541
      %vm543 = vcmp.lt.s32.totalorder %v321, 95
      %v544 = vsel %vm543, %v540, %v542
      %v545 = vsel %vm543, %v542, %v540
      %v546 = vlaneseq
      %v547 = vshrl.u32 %v546, 7
      %v548 = vsub.s32 6, %v547
      %v549 = vrot.slane %v309, %v548
      %v550 = vlaneseq
      %v551 = vshrl.u32 %v550, 7
      %v552 = vsub.s32 6, %v551
      %v553 = vrot.slane %v310, %v552
      %v554 = vmul.f32 %v544, %v549
      %v555 = vmul.f32 %v545, %v553
      %556 = vrot.lane.b32.xlu0 %v311, 94
      %v557 = vpop.permute.xlu0 %556
      %558 = vrot.lane.b32.xlu0 %v314, 94
      %v559 = vpop.permute.xlu0 %558
      %vm560 = vcmp.lt.s32.totalorder %v321, 94
      %v561 = vsel %vm560, %v557, %v559
      %v562 = vsel %vm560, %v559, %v557
      %v563 = vlaneseq
      %v564 = vshrl.u32 %v563, 7
      %v565 = vsub.s32 7, %v564
      %v566 = vrot.slane %v309, %v565
      %v567 = vlaneseq
      %v568 = vshrl.u32 %v567, 7
      %v569 = vsub.s32 7, %v568
      %v570 = vrot.slane %v310, %v569
      %v571 = vmul.f32 %v561, %v566
      %v572 = vmul.f32 %v562, %v570
      %v575 = vrot.slane %v350, 4
      %v576 = vrot.slane %v351, 4
      %v581 = vrot.slane %v384, 4
      %v582 = vrot.slane %v385, 4
      %v585 = vcombine.low %v311, %v311
      %v589 = vrot.slane %v435, 4
      %v590 = vrot.slane %v436, 4
      %v595 = vrot.slane %v469, 4
      %v596 = vrot.slane %v470, 4
      %v601 = vrot.slane %v503, 4
      %v602 = vrot.slane %v504, 4
      %v607 = vrot.slane %v537, 4
      %v608 = vrot.slane %v538, 4
      %v613 = vrot.slane %v571, 4
      %v614 = vrot.slane %v572, 4
      %vm617 = vcmask 1043456
      %v618 = vsel %vm617, %v333, %v575
      %v619 = vsel %vm617, %v334, %v576
      %v620 = vsel %vm617, %v367, %v581
      %v621 = vsel %vm617, %v368, %v582
      %v622 = vsel %vm617, %v401, %v585
      %v623 = vsel %vm617, %v402, %v311
      %v624 = vsel %vm617, %v418, %v589
      %v625 = vsel %vm617, %v419, %v590
      %v626 = vsel %vm617, %v452, %v595
      %v627 = vsel %vm617, %v453, %v596
      %v628 = vsel %vm617, %v486, %v601
      %v629 = vsel %vm617, %v487, %v602
      %v630 = vsel %vm617, %v520, %v607
      %v631 = vsel %vm617, %v521, %v608
      %v632 = vsel %vm617, %v554, %v613
      %v633 = vsel %vm617, %v555, %v614
      %v634 = vpack.c.bf16 %v620, %v618
      %v635 = vpack.c.bf16 %v621, %v619
      %v636 = vpack.c.bf16 %v624, %v622
      %v637 = vpack.c.bf16 %v625, %v623
      %v638 = vpack.c.bf16 %v628, %v626
      %v639 = vpack.c.bf16 %v629, %v627
      %v640 = vpack.c.bf16 %v632, %v630
      %v641 = vpack.c.bf16 %v633, %v631
      %v642 = vld [vmem:[%s3] sm:$0xff]
      %644 = vset.pattern.permute.xlu0 0
      %645 = vperm.xlu0 %644, %v642
      %v646 = vpop.permute.xlu0 %645
      %vm648 = vcmask 523264
      %v650 = vsel %vm648, %v312, 0
      %652 = vmatprep.subr.bf16.mxu0 %v635
      %653 = vmatpush1.bf16.msra.mxu0 %v634
      %654 = vmatprep.subr.bf16.mxu0 %v637
      %655 = vmatpush1.bf16.msra.mxu0 %v636
      %656 = vmatprep.subr.bf16.mxu0 %v639
      %657 = vmatpush1.bf16.msra.mxu0 %v638
      %658 = vmatprep.subr.bf16.mxu0 %v641
      %659 = vmatpush1.bf16.msra.mxu0 %v640
      %660 = vmatprep.subr.bf16.mxu0 0
      %661 = vmatpush1.bf16.msra.mxu0 0
      %662 = vmatprep.subr.bf16.mxu0 0
      %663 = vmatpush1.bf16.msra.mxu0 0
      %664 = vmatprep.subr.bf16.mxu0 0
      %665 = vmatpush1.bf16.msra.mxu0 0
      %666 = vmatprep.subr.bf16.mxu0 0
      %667 = vmatpush1.bf16.msra.mxu0 0
      %668 = vmatprep.subr.bf16.mxu0 0
      %669 = vmatpush1.bf16.msra.mxu0 0
      %670 = vmatprep.subr.bf16.mxu0 0
      %671 = vmatpush1.bf16.msra.mxu0 0
      %672 = vmatprep.subr.bf16.mxu0 0
      %673 = vmatpush1.bf16.msra.mxu0 0
      %674 = vmatprep.subr.bf16.mxu0 0
      %675 = vmatpush1.bf16.msra.mxu0 0
      %676 = vmatprep.subr.bf16.mxu0 0
      %677 = vmatpush1.bf16.msra.mxu0 0
      %678 = vmatprep.subr.bf16.mxu0 0
      %679 = vmatpush1.bf16.msra.mxu0 0
      %680 = vmatprep.subr.bf16.mxu0 0
      %681 = vmatpush1.bf16.msra.mxu0 0
      %682 = vmatprep.subr.bf16.mxu0 0
      %683 = vmatpush1.bf16.msra.mxu0 0
      %684 = vmatprep.mubr.bf16.mxu0 0
      %685 = vmatmul.mubr.bf16.gmra.mrb[0].mxu0 %v650
      %v686 = vpop.f32.mrb[0].mxu0
      %v687 = vadd.f32 %v646, %v686
      %v688 = vpop.f32.mrb[0].mxu0
      %v689 = vadd.f32 %v646, %v688
      %v690 = vpop.f32.mrb[0].mxu0
      %v691 = vpop.f32.mrb[0].mxu0
      %692 = vdwg.mxu0
      %vm693 = vcmp.ge.f32.partialorder %v687, 0.0
      %vm694 = vcmp.ge.f32.partialorder %v689, 0.0
      %v695 = vmul.f32 %v687, 0.01
      %v696 = vmul.f32 %v689, 0.01
      %v697 = vsel %vm693, %v687, %v695
      %v698 = vsel %vm694, %v689, %v696
      %v699 = vld [vmem:[%s4] sm:$0xf]
      %700 = vrot.lane.b32.xlu0 %v697, 17
      %v701 = vpop.permute.xlu0 %700
      %702 = vrot.lane.b32.xlu0 %v698, 17
      %v703 = vpop.permute.xlu0 %702
      %v704 = vsel %vm322, %v701, %v703
      %v705 = vsel %vm322, %v703, %v701
      %v706 = vmul.f32 %v705, %v328
      %v707 = vmul.f32 %v704, %v332
      %708 = vrot.lane.b32.xlu0 %v697, 16
      %v709 = vpop.permute.xlu0 %708
      %710 = vrot.lane.b32.xlu0 %v698, 16
      %v711 = vpop.permute.xlu0 %710
      %v712 = vsel %vm339, %v709, %v711
      %v713 = vsel %vm339, %v711, %v709
      %v714 = vmul.f32 %v713, %v345
      %v715 = vmul.f32 %v712, %v349
      %716 = vrot.lane.b32.xlu0 %v697, 15
      %v717 = vpop.permute.xlu0 %716
      %718 = vrot.lane.b32.xlu0 %v698, 15
      %v719 = vpop.permute.xlu0 %718
      %v720 = vsel %vm356, %v717, %v719
      %v721 = vsel %vm356, %v719, %v717
      %v722 = vmul.f32 %v721, %v362
      %v723 = vmul.f32 %v720, %v366
      %724 = vrot.lane.b32.xlu0 %v697, 14
      %v725 = vpop.permute.xlu0 %724
      %726 = vrot.lane.b32.xlu0 %v698, 14
      %v727 = vpop.permute.xlu0 %726
      %v728 = vsel %vm373, %v725, %v727
      %v729 = vsel %vm373, %v727, %v725
      %v730 = vmul.f32 %v729, %v379
      %v731 = vmul.f32 %v728, %v383
      %732 = vrot.lane.b32.xlu0 %v697, 1
      %v733 = vpop.permute.xlu0 %732
      %734 = vrot.lane.b32.xlu0 %v698, 1
      %v735 = vpop.permute.xlu0 %734
      %v736 = vsel %vm390, %v733, %v735
      %v737 = vsel %vm390, %v735, %v733
      %v738 = vmul.f32 %v737, %v396
      %v739 = vmul.f32 %v736, %v400
      %740 = vrot.lane.b32.xlu0 %v697, 127
      %v741 = vpop.permute.xlu0 %740
      %742 = vrot.lane.b32.xlu0 %v698, 127
      %v743 = vpop.permute.xlu0 %742
      %v744 = vsel %vm407, %v741, %v743
      %v745 = vsel %vm407, %v743, %v741
      %v746 = vmul.f32 %v744, %v413
      %v747 = vmul.f32 %v745, %v417
      %748 = vrot.lane.b32.xlu0 %v697, 126
      %v749 = vpop.permute.xlu0 %748
      %750 = vrot.lane.b32.xlu0 %v698, 126
      %v751 = vpop.permute.xlu0 %750
      %v752 = vsel %vm424, %v749, %v751
      %v753 = vsel %vm424, %v751, %v749
      %v754 = vmul.f32 %v752, %v430
      %v755 = vmul.f32 %v753, %v434
      %756 = vrot.lane.b32.xlu0 %v697, 113
      %v757 = vpop.permute.xlu0 %756
      %758 = vrot.lane.b32.xlu0 %v698, 113
      %v759 = vpop.permute.xlu0 %758
      %v760 = vsel %vm441, %v757, %v759
      %v761 = vsel %vm441, %v759, %v757
      %v762 = vmul.f32 %v760, %v447
      %v763 = vmul.f32 %v761, %v451
      %764 = vrot.lane.b32.xlu0 %v697, 112
      %v765 = vpop.permute.xlu0 %764
      %766 = vrot.lane.b32.xlu0 %v698, 112
      %v767 = vpop.permute.xlu0 %766
      %v768 = vsel %vm458, %v765, %v767
      %v769 = vsel %vm458, %v767, %v765
      %v770 = vmul.f32 %v768, %v464
      %v771 = vmul.f32 %v769, %v468
      %772 = vrot.lane.b32.xlu0 %v697, 111
      %v773 = vpop.permute.xlu0 %772
      %774 = vrot.lane.b32.xlu0 %v698, 111
      %v775 = vpop.permute.xlu0 %774
      %v776 = vsel %vm475, %v773, %v775
      %v777 = vsel %vm475, %v775, %v773
      %v778 = vmul.f32 %v776, %v481
      %v779 = vmul.f32 %v777, %v485
      %780 = vrot.lane.b32.xlu0 %v697, 110
      %v781 = vpop.permute.xlu0 %780
      %782 = vrot.lane.b32.xlu0 %v698, 110
      %v783 = vpop.permute.xlu0 %782
      %v784 = vsel %vm492, %v781, %v783
      %v785 = vsel %vm492, %v783, %v781
      %v786 = vmul.f32 %v784, %v498
      %v787 = vmul.f32 %v785, %v502
      %788 = vrot.lane.b32.xlu0 %v697, 97
      %v789 = vpop.permute.xlu0 %788
      %790 = vrot.lane.b32.xlu0 %v698, 97
      %v791 = vpop.permute.xlu0 %790
      %v792 = vsel %vm509, %v789, %v791
      %v793 = vsel %vm509, %v791, %v789
      %v794 = vmul.f32 %v792, %v515
      %v795 = vmul.f32 %v793, %v519
      %796 = vrot.lane.b32.xlu0 %v697, 96
      %v797 = vpop.permute.xlu0 %796
      %798 = vrot.lane.b32.xlu0 %v698, 96
      %v799 = vpop.permute.xlu0 %798
      %v800 = vsel %vm526, %v797, %v799
      %v801 = vsel %vm526, %v799, %v797
      %v802 = vmul.f32 %v800, %v532
      %v803 = vmul.f32 %v801, %v536
      %804 = vrot.lane.b32.xlu0 %v697, 95
      %v805 = vpop.permute.xlu0 %804
      %806 = vrot.lane.b32.xlu0 %v698, 95
      %v807 = vpop.permute.xlu0 %806
      %v808 = vsel %vm543, %v805, %v807
      %v809 = vsel %vm543, %v807, %v805
      %v810 = vmul.f32 %v808, %v549
      %v811 = vmul.f32 %v809, %v553
      %812 = vrot.lane.b32.xlu0 %v697, 94
      %v813 = vpop.permute.xlu0 %812
      %814 = vrot.lane.b32.xlu0 %v698, 94
      %v815 = vpop.permute.xlu0 %814
      %v816 = vsel %vm560, %v813, %v815
      %v817 = vsel %vm560, %v815, %v813
      %v818 = vmul.f32 %v816, %v566
      %v819 = vmul.f32 %v817, %v570
      %v820 = vpack.c.bf16 %v714, %v706
      %v821 = vpack.c.bf16 %v715, %v707
      %v822 = vpack.c.bf16 %v730, %v722
      %v823 = vpack.c.bf16 %v731, %v723
      %v824 = vpack.c.bf16 %v697, %v738
      %v825 = vpack.c.bf16 %v698, %v739
      %v826 = vpack.c.bf16 %v754, %v746
      %v827 = vpack.c.bf16 %v755, %v747
      %v828 = vpack.c.bf16 %v770, %v762
      %v829 = vpack.c.bf16 %v771, %v763
      %v830 = vpack.c.bf16 %v786, %v778
      %v831 = vpack.c.bf16 %v787, %v779
      %v832 = vpack.c.bf16 %v802, %v794
      %v833 = vpack.c.bf16 %v803, %v795
      %v834 = vpack.c.bf16 %v818, %v810
      %v835 = vpack.c.bf16 %v819, %v811
      %v836 = vld [vmem:[%s5] sm:$0xff]
      %838 = vset.pattern.permute.xlu0 0
      %839 = vperm.xlu0 %838, %v836
      %v840 = vpop.permute.xlu0 %839
      %842 = vmatprep.subr.bf16.mxu0 %v821
      %843 = vmatpush1.bf16.msra.mxu0 %v820
      %844 = vmatprep.subr.bf16.mxu0 %v823
      %845 = vmatpush1.bf16.msra.mxu0 %v822
      %846 = vmatprep.subr.bf16.mxu0 %v825
      %847 = vmatpush1.bf16.msra.mxu0 %v824
      %848 = vmatprep.subr.bf16.mxu0 %v827
      %849 = vmatpush1.bf16.msra.mxu0 %v826
      %850 = vmatprep.subr.bf16.mxu0 %v829
      %851 = vmatpush1.bf16.msra.mxu0 %v828
      %852 = vmatprep.subr.bf16.mxu0 %v831
      %853 = vmatpush1.bf16.msra.mxu0 %v830
      %854 = vmatprep.subr.bf16.mxu0 %v833
      %855 = vmatpush1.bf16.msra.mxu0 %v832
      %856 = vmatprep.subr.bf16.mxu0 %v835
      %857 = vmatpush1.bf16.msra.mxu0 %v834
      %858 = vmatprep.subr.bf16.mxu0 0
      %859 = vmatpush1.bf16.msra.mxu0 0
      %860 = vmatprep.subr.bf16.mxu0 0
      %861 = vmatpush1.bf16.msra.mxu0 0
      %862 = vmatprep.subr.bf16.mxu0 0
      %863 = vmatpush1.bf16.msra.mxu0 0
      %864 = vmatprep.subr.bf16.mxu0 0
      %865 = vmatpush1.bf16.msra.mxu0 0
      %866 = vmatprep.subr.bf16.mxu0 0
      %867 = vmatpush1.bf16.msra.mxu0 0
      %868 = vmatprep.subr.bf16.mxu0 0
      %869 = vmatpush1.bf16.msra.mxu0 0
      %870 = vmatprep.subr.bf16.mxu0 0
      %871 = vmatpush1.bf16.msra.mxu0 0
      %872 = vmatprep.subr.bf16.mxu0 0
      %873 = vmatpush1.bf16.msra.mxu0 0
      %874 = vmatprep.mubr.bf16.mxu0 0
      %875 = vmatmul.mubr.bf16.gmra.mrb[0].mxu0 %v699
      %v876 = vpop.f32.mrb[0].mxu0
      %v877 = vadd.f32 %v840, %v876
      %v878 = vpop.f32.mrb[0].mxu0
      %v879 = vadd.f32 %v840, %v878
      %v880 = vpop.f32.mrb[0].mxu0
      %v881 = vpop.f32.mrb[0].mxu0
      %882 = vdwg.mxu0
      %v883 = vld [vmem:[%s6] sm:$0xf]
      %v884 = vpack.c.bf16 %v311, %v311
      %v885 = vpack.c.bf16 %v314, %v314
      %v886 = vld [vmem:[%s7] sm:$0xff]
      %888 = vset.pattern.permute.xlu0 0
      %889 = vperm.xlu0 %888, %v886
      %v890 = vpop.permute.xlu0 %889
      %vm892 = vcmask 31744
      %v894 = vsel %vm892, %v883, 0
      %vm896 = vcmask 1041408
      %v898 = vsel %vm896, %v884, 0
      %v901 = vsel %vm896, %v885, 0
      %903 = vmatprep.subr.bf16.mxu0 %v901
      %904 = vmatpush1.bf16.msra.mxu0 %v898
      %905 = vmatprep.subr.bf16.mxu0 0
      %906 = vmatpush1.bf16.msra.mxu0 0
      %907 = vmatprep.subr.bf16.mxu0 0
      %908 = vmatpush1.bf16.msra.mxu0 0
      %909 = vmatprep.subr.bf16.mxu0 0
      %910 = vmatpush1.bf16.msra.mxu0 0
      %911 = vmatprep.subr.bf16.mxu0 0
      %912 = vmatpush1.bf16.msra.mxu0 0
      %913 = vmatprep.subr.bf16.mxu0 0
      %914 = vmatpush1.bf16.msra.mxu0 0
      %915 = vmatprep.subr.bf16.mxu0 0
      %916 = vmatpush1.bf16.msra.mxu0 0
      %917 = vmatprep.subr.bf16.mxu0 0
      %918 = vmatpush1.bf16.msra.mxu0 0
      %919 = vmatprep.subr.bf16.mxu0 0
      %920 = vmatpush1.bf16.msra.mxu0 0
      %921 = vmatprep.subr.bf16.mxu0 0
      %922 = vmatpush1.bf16.msra.mxu0 0
      %923 = vmatprep.subr.bf16.mxu0 0
      %924 = vmatpush1.bf16.msra.mxu0 0
      %925 = vmatprep.subr.bf16.mxu0 0
      %926 = vmatpush1.bf16.msra.mxu0 0
      %927 = vmatprep.subr.bf16.mxu0 0
      %928 = vmatpush1.bf16.msra.mxu0 0
      %929 = vmatprep.subr.bf16.mxu0 0
      %930 = vmatpush1.bf16.msra.mxu0 0
      %931 = vmatprep.subr.bf16.mxu0 0
      %932 = vmatpush1.bf16.msra.mxu0 0
      %933 = vmatprep.subr.bf16.mxu0 0
      %934 = vmatpush1.bf16.msra.mxu0 0
      %935 = vmatprep.mubr.bf16.mxu0 0
      %936 = vmatmul.mubr.bf16.gmra.mrb[0].mxu0 %v894
      %v937 = vpop.f32.mrb[0].mxu0
      %v938 = vadd.f32 %v890, %v937
      %v939 = vpop.f32.mrb[0].mxu0
      %v940 = vadd.f32 %v890, %v939
      %v941 = vpop.f32.mrb[0].mxu0
      %v942 = vpop.f32.mrb[0].mxu0
      %943 = vdwg.mxu0
      %v944 = vadd.f32 %v877, %v938
      %v945 = vadd.f32 %v879, %v940
      %vm946 = vcmp.ge.f32.partialorder %v944, 0.0
      %vm947 = vcmp.ge.f32.partialorder %v945, 0.0
      %v948 = vmul.f32 %v944, 0.01
      %v949 = vmul.f32 %v945, 0.01
      %v950 = vsel %vm946, %v944, %v948
      %v951 = vsel %vm947, %v945, %v949
      %952 = vst [vmem:[%s305] sm:$0xff] %v950
      %953 = vst [vmem:[%s305 + $0x8] sm:$0xff] %v951
      %p954 = scmp.lt.s32.totalorder %s19, 1
      %s955 = scalar_select %p954, %s19, 1
      %s956 = smul.addr %s955, 2
      %s957 = smul.addr %s956, 8
      %s958 = scalar_lea.vmem %s8, %s957
      // Predicated region
      $region53: #{seed_deep_layer_forward.1} parent=51 // pred_check
        %p959 = pneg %p210
      $region54: #{seed_deep_layer_forward.1} parent=51 // pred_check_branch
        %961 = sbr.rel (%p959) target = $region56
      $region55: #{seed_deep_layer_forward.1} parent=51 // pred_region
        _
      $region56: #{seed_deep_layer_forward.1} parent=51 // pred_fallthru
        _
    $region52: #{seed_deep_layer_forward.1} parent=5 // pred_fallthru
      _
    %p962 = scmp.le.s32.totalorder 2, %s14
    // Predicated region
    $region57: #{seed_deep_layer_forward.1} parent=5 // pred_check
      %p963 = pneg %p962
    $region58: #{seed_deep_layer_forward.1} parent=5 // pred_check_branch
      %965 = sbr.rel (%p963) target = $region60
    $region59: #{seed_deep_layer_forward.1} parent=5 // pred_region
      %s966 = ssub.s32 %s14, 2
      // Predicated region
      $region61: #{seed_deep_layer_forward.1} parent=59 // pred_check
        %p967 = pneg %p216
      $region62: #{seed_deep_layer_forward.1} parent=59 // pred_check_branch
        %969 = sbr.rel (%p967) target = $region64
      $region63: #{seed_deep_layer_forward.1} parent=59 // pred_region
        %p970 = scmp.lt.s32.totalorder %s20, 1
        %s971 = scalar_select %p970, %s20, 1
        %s972 = smul.addr %s971, 2
        %s973 = smul.addr %s972, 8
        %s974 = scalar_lea.vmem %s8, %s973
      $region64: #{seed_deep_layer_forward.1} parent=59 // pred_fallthru
        _
    $region60: #{seed_deep_layer_forward.1} parent=5 // pred_fallthru
      _
  $region6: #{seed_deep_layer_forward.1} parent=0 // loop_footer
    %s18 = sadd.s32 1, %s14
  $region7: #{seed_deep_layer_forward.1} parent=0 // loop_footer_branch
    %13 = sbr.rel target = $region3
  $region8: #{seed_deep_layer_forward.1} parent=0 // loop_exit
    _

</llo_original>
